<compile_context>
chip_gen: v7x
topology: tpu7x:2x2x1
jax: 0.10.0
libtpu: 0.0.40
codegen_flags: <defaults>
</compile_context>

<pallas_src>
import functools

import jax
import jax.numpy as jnp
from jax import lax
from jax.experimental import pallas as pl
from jax.experimental.pallas import tpu as pltpu

_LANE = 128
_SUBLANE = 8
_MIB = 1024 * 1024


def _round_up(v: int, m: int) -> int:
    return ((v + m - 1) // m) * m


def _fast_recip(x):
    # EUP approximate reciprocal refined with one Newton-Raphson step:
    # near-f32 accuracy while the expensive part stays on the otherwise-idle
    # EUP slot instead of a multi-op VPU divide sequence.
    r = pl.reciprocal(x, approx=True)
    return r * (2.0 - x * r)


# --------------------------------------------------------------------------- #
# Shared per-tile math and epilogue math.
# --------------------------------------------------------------------------- #
def _tile_partials(x_raw, row0, t, n_sample, mxu_dtype):
    """One sample-tile's contribution: (A_partial (Cp,Cp), sum(w0) (1,1))."""
    x = x_raw.astype(jnp.float32)                       # (tile_n, Cp)
    tile_n = x.shape[0]

    z = x * (1.0 / t)
    zc = z - jnp.max(z, axis=1, keepdims=True)          # log of unnormalized prob
    e = jnp.exp(zc)                                      # (tile_n, Cp), in (0, 1]
    denom = jnp.sum(e, axis=1, keepdims=True)            # (tile_n, 1)
    recip = _fast_recip(denom)

    # Entropy of p = e * recip WITHOUT materializing p and with a single log
    # per ROW: H = -sum p*log p = log(denom) - recip * sum(e * zc).
    # TODO(synk): drops torch's +1e-5 inside log(p + 1e-5); the deviation is
    # O(1e-5) per element, well below the bf16 MXU-feed error.
    ent = jnp.log(denom) - recip * jnp.sum(e * zc, axis=1, keepdims=True)
    w0 = 1.0 + jnp.exp(-ent)                              # (tile_n, 1)

    # Zero the contribution of padded sample rows.
    row = row0 + lax.broadcasted_iota(jnp.int32, (tile_n, 1), 0)
    w0 = jnp.where(row < n_sample, w0, 0.0)

    # (p*w0)^T @ p == (e*s)^T @ e with per-row s = w0 / denom^2  (p never built).
    s = w0 * (recip * recip)
    # NOTE: the dim-0/dim-0 contraction (A^T B) is natively supported by the
    # MXU; no explicit XLU transpose of the (tile_n, Cp) tile is required.
    a_part = lax.dot_general(
        (e * s).astype(mxu_dtype), e.astype(mxu_dtype),
        dimension_numbers=(((0,), (0,)), ((), ())),
        preferred_element_type=jnp.float32)               # (Cp, Cp)
    w_part = jnp.sum(w0, axis=0, keepdims=True)            # (1, 1)
    return a_part, w_part


def _epilogue_math(a, w_sum, n_sample, n_class):
    """(Cp,Cp) accumulator + scalar sum(w0)  ->  (1,1) MCC loss."""
    c_pad = a.shape[-1]

    # Factored entropy-weight normalization: ccm = (N / sum(w0)) * A.
    ccm = a * (n_sample * _fast_recip(w_sum))

    # torch: ccm / ccm.sum(dim=1) broadcasts the (C,) row-sum over the LAST
    # axis, i.e. element [i, j] is divided by rowsum[j]. (Intentional — do not
    # "fix" to the usual row-normalized formulation.)
    ones_row = jnp.ones((1, c_pad), jnp.float32)
    rowsum_row = lax.dot_general(            # rowsum_row[0, j] = sum_k ccm[j, k]
        ones_row, ccm,
        dimension_numbers=(((1,), (1,)), ((), ())),
        preferred_element_type=jnp.float32)                # (1, Cp)
    colsum_row = jnp.sum(ccm, axis=0, keepdims=True)        # (1, Cp)

    ri = lax.broadcasted_iota(jnp.int32, (c_pad, c_pad), 0)
    ci = lax.broadcasted_iota(jnp.int32, (c_pad, c_pad), 1)
    diag_row = jnp.sum(jnp.where(ri == ci, ccm, 0.0), axis=0, keepdims=True)

    # Padded class columns have rowsum == 0; guard BEFORE the reciprocal so no
    # Inf/NaN is ever produced, then mask them out of the final sum.
    col_valid = lax.broadcasted_iota(jnp.int32, (1, c_pad), 1) < n_class
    safe_rowsum = jnp.where(col_valid, rowsum_row, 1.0)
    contrib = jnp.where(
        col_valid, (colsum_row - diag_row) * _fast_recip(safe_rowsum), 0.0)
    return jnp.sum(contrib, axis=1, keepdims=True) * (1.0 / n_class)   # (1, 1)


# --------------------------------------------------------------------------- #
# Kernel bodies.
# --------------------------------------------------------------------------- #
def _ccm_fused_kernel(x_ref, o_ref, a_acc, w_acc, *, t, n_sample, n_class,
                      tile_n, mxu_dtype):
    """Single-TensorCore path: streaming reduction + fused epilogue."""
    step = pl.program_id(0)

    @pl.when(step == 0)
    def _():
        a_acc[...] = jnp.zeros_like(a_acc)
        w_acc[...] = jnp.zeros_like(w_acc)
        o_ref[...] = jnp.zeros_like(o_ref)

    a_part, w_part = _tile_partials(x_ref[...], step * tile_n, t, n_sample,
                                    mxu_dtype)
    a_acc[...] += a_part
    w_acc[...] += w_part

    @pl.when(step == pl.num_programs(0) - 1)
    def _():
        o_ref[...] = _epilogue_math(a_acc[...], w_acc[...], n_sample,
                                    n_class).astype(o_ref.dtype)


def _ccm_partial_kernel(x_ref, a_ref, w_ref, *, t, n_sample, tile_n,
                        tiles_per_split, mxu_dtype):
    """Multi-TensorCore path: per-split streaming partials."""
    split = pl.program_id(0)        # parallel axis (megacore split)
    step = pl.program_id(1)         # reduction axis over N tiles

    @pl.when(step == 0)
    def _():
        a_ref[...] = jnp.zeros_like(a_ref)
        w_ref[...] = jnp.zeros_like(w_ref)

    row0 = (split * tiles_per_split + step) * tile_n
    a_part, w_part = _tile_partials(x_ref[...], row0, t, n_sample, mxu_dtype)
    a_ref[...] += a_part
    w_ref[...] += w_part


def _mcc_epilogue_kernel(a_ref, w_ref, o_ref, *, n_sample, n_class):
    """Tiny epilogue combining per-split partials (multi-TensorCore path)."""
    a = jnp.sum(a_ref[...], axis=0)                 # (Cp, Cp)
    w_sum = jnp.sum(w_ref[...], axis=0)             # (1, 1)
    o_ref[...] = _epilogue_math(a, w_sum, n_sample, n_class).astype(o_ref.dtype)


# --------------------------------------------------------------------------- #
# Wrapper
# --------------------------------------------------------------------------- #
def _vmem_capacity_bytes() -> int:
    try:
        return int(pltpu.get_tpu_info().vmem_capacity_bytes)
    except Exception:
        return 64 * _MIB               # conservative default (v7x per-core VMEM)


def _num_tensorcores() -> int:
    # Defensive probe; defaults to 1 (v5e/v6e behavior) if it cannot be told.
    try:
        info = pltpu.get_tpu_info()
    except Exception:
        return 1
    for attr in ("num_cores", "core_count", "num_tensorcores",
                 "tensorcore_count", "cores_per_chip"):
        v = getattr(info, attr, None)
        if isinstance(v, int) and v > 0:
            return v
    return 1


def _pick_tile_n(n_sample, c_pad, in_itemsize, n_split, vmem_budget):
    # Budget: 2 double-buffered (tile_n, Cp) input tiles + ~6 live f32
    # (tile_n, Cp) temporaries + the resident (Cp, Cp) f32 accumulator + slack.
    budget = vmem_budget - c_pad * c_pad * 4 - 2 * _MIB
    per_row = c_pad * (2 * in_itemsize + 6 * 4)
    tile = budget // max(per_row, 1)
    tile = max(_SUBLANE, min(8192, (tile // _SUBLANE) * _SUBLANE))
    # Don't blow up tiny batches with padding.
    tile = min(tile, _round_up(pl.cdiv(n_sample, n_split), _SUBLANE))
    return max(tile, _SUBLANE)


def class_confusion_loss(output, t: float = 2.0, *, tile_n=None,
                         mxu_dtype=jnp.bfloat16, n_split=None,
                         stream_dtype=None):
    """Pallas TPU implementation of ClassConfusionLoss.forward. Returns a scalar."""
    n_sample, n_class = output.shape
    c_pad = _round_up(n_class, _LANE)

    # Optional: stream the logits as bf16 (halves HBM traffic on the
    # bandwidth-bound v5e/v6e f32-input case); in-kernel math stays f32.
    if stream_dtype is not None:
        output = output.astype(stream_dtype)

    if n_split is None:
        # 2-way "parallel" split only pays on multi-TensorCore chips (v7x); on
        # 1-TC v5e/v6e it is just a serial loop with extra padding/accumulators.
        n_split = 2 if _num_tensorcores() >= 2 else 1
    n_split = max(1, int(n_split))

    # VMEM sizing: be conservative about per-core capacity (v7x = 64 MiB/TC and
    # get_tpu_info may report per-chip), leave headroom for Mosaic scratch.
    per_core_vmem = min(_vmem_capacity_bytes(), 64 * _MIB)
    vmem_limit = per_core_vmem - 8 * _MIB          # scoped limit passed to Mosaic
    tile_budget = vmem_limit - 8 * _MIB            # what the tile sizing may use

    if tile_n is None:
        tile_n = _pick_tile_n(n_sample, c_pad, output.dtype.itemsize,
                              n_split, tile_budget)
    tile_n = max(_SUBLANE, _round_up(int(tile_n), _SUBLANE))

    tiles_per_split = pl.cdiv(n_sample, n_split * tile_n)
    n_pad = n_split * tiles_per_split * tile_n

    # Pad the class axis with a huge negative logit (softmax prob exactly 0),
    # pad the sample axis with zero rows (masked inside the kernel). Input is
    # kept in its streaming dtype — the f32 upcast happens inside the kernel.
    x = output
    if c_pad != n_class:
        x = jnp.pad(x, ((0, 0), (0, c_pad - n_class)),
                    constant_values=jnp.finfo(x.dtype).min)
    if n_pad != n_sample:
        x = jnp.pad(x, ((0, n_pad - n_sample), (0, 0)))

    if n_split == 1:
        # Fused single-call path: epilogue runs under pl.when on the last tile;
        # the (Cp, Cp) partial never round-trips through HBM.
        kernel = functools.partial(
            _ccm_fused_kernel, t=float(t), n_sample=n_sample, n_class=n_class,
            tile_n=tile_n, mxu_dtype=mxu_dtype)
        out = pl.pallas_call(
            kernel,
            out_shape=jax.ShapeDtypeStruct((1, 1), jnp.float32),
            grid=(tiles_per_split,),
            in_specs=[pl.BlockSpec((tile_n, c_pad), lambda i: (i, 0))],
            out_specs=pl.BlockSpec((1, 1), lambda i: (0, 0)),
            scratch_shapes=[pltpu.VMEM((c_pad, c_pad), jnp.float32),
                            pltpu.VMEM((1, 1), jnp.float32)],
            compiler_params=pltpu.CompilerParams(
                dimension_semantics=("arbitrary",),
                vmem_limit_bytes=int(vmem_limit)),
        )(x)
        return out[0, 0]

    # Multi-TensorCore path (v7x): per-split streaming partials + tiny epilogue.
    kernel1 = functools.partial(
        _ccm_partial_kernel, t=float(t), n_sample=n_sample, tile_n=tile_n,
        tiles_per_split=tiles_per_split, mxu_dtype=mxu_dtype)
    a_parts, w_parts = pl.pallas_call(
        kernel1,
        out_shape=(jax.ShapeDtypeStruct((n_split, c_pad, c_pad), jnp.float32),
                   jax.ShapeDtypeStruct((n_split, 1, 1), jnp.float32)),
        grid=(n_split, tiles_per_split),
        in_specs=[pl.BlockSpec((tile_n, c_pad),
                               lambda s, i: (s * tiles_per_split + i, 0))],
        out_specs=(pl.BlockSpec((None, c_pad, c_pad), lambda s, i: (s, 0, 0)),
                   pl.BlockSpec((None, 1, 1), lambda s, i: (s, 0, 0))),
        compiler_params=pltpu.CompilerParams(
            dimension_semantics=("parallel", "arbitrary"),
            vmem_limit_bytes=int(vmem_limit)),
    )(x)

    kernel2 = functools.partial(_mcc_epilogue_kernel,
                                n_sample=n_sample, n_class=n_class)
    out = pl.pallas_call(
        kernel2,
        out_shape=jax.ShapeDtypeStruct((1, 1), jnp.float32),
        in_specs=[pl.BlockSpec((n_split, c_pad, c_pad), lambda: (0, 0, 0)),
                  pl.BlockSpec((n_split, 1, 1), lambda: (0, 0, 0))],
        out_specs=pl.BlockSpec((1, 1), lambda: (0, 0)),
    )(a_parts, w_parts)
    return out[0, 0]


# --------------------------------------------------------------------------- #
# Pure-JAX reference mirroring the PyTorch module exactly.
# --------------------------------------------------------------------------- #
def _reference(output, t: float = 2.0):
    n_sample, n_class = output.shape
    x = output.astype(jnp.float32)
    p = jax.nn.softmax(x / t, axis=1)
    ent = -jnp.sum(p * jnp.log(p + 1e-05), axis=1)
    w = 1.0 + jnp.exp(-ent)
    w = (n_sample * w / jnp.sum(w))[:, None]
    ccm = (p * w).T @ p
    ccm = ccm / jnp.sum(ccm, axis=1)     # torch broadcast: divide col j by rowsum[j]
    return (jnp.sum(ccm) - jnp.trace(ccm)) / n_class


if __name__ == "__main__":
    key = jax.random.PRNGKey(0)
    # Small, deliberately unaligned shapes to exercise class padding (40 -> 128)
    # and sample-row masking.
    n_sample, n_class = 100, 40
    logits = jax.random.normal(key, (n_sample, n_class), dtype=jnp.float32) * 3.0

    ref = _reference(logits, t=2.0)

    # Default path: hardware-selected split, VMEM-derived tile, bf16 MXU feeds.
    loss = jax.block_until_ready(class_confusion_loss(logits, t=2.0))
    assert jnp.allclose(loss, ref, rtol=2e-2, atol=1e-3), (loss, ref)

    # Fused single-call path: forced multi-tile streaming (7 tiles), f32 feeds.
    loss_fused = jax.block_until_ready(
        class_confusion_loss(logits, t=2.0, tile_n=16,
                             mxu_dtype=jnp.float32, n_split=1))
    assert jnp.allclose(loss_fused, ref, rtol=2e-3, atol=1e-4), (loss_fused, ref)

    # Two-call split path (v7x megacore layout): forced multi-tile, f32 feeds.
    loss_split = jax.block_until_ready(
        class_confusion_loss(logits, t=2.0, tile_n=16,
                             mxu_dtype=jnp.float32, n_split=2))
    assert jnp.allclose(loss_split, ref, rtol=2e-3, atol=1e-4), (loss_split, ref)

    # bf16 streaming (halves HBM traffic on bandwidth-bound v5e/v6e).
    loss_bf16 = jax.block_until_ready(
        class_confusion_loss(logits, t=2.0, stream_dtype=jnp.bfloat16))
    assert jnp.allclose(loss_bf16, ref, rtol=5e-2, atol=5e-3), (loss_bf16, ref)

    print("KERNEL_OK")
</pallas_src>

<mosaic_0001>
module attributes {stable_mosaic.version = 11 : i64} {
  func.func @_ccm_fused_kernel(%arg0: i32, %arg1: memref<104x128xf32, #tpu.memory_space<vmem>>, %arg2: memref<1x1xf32, #tpu.memory_space<vmem>>, %arg3: memref<128x128xf32, #tpu.memory_space<vmem>>, %arg4: memref<1x1xf32, #tpu.memory_space<vmem>>) attributes {dimension_semantics = [#tpu.dimension_semantics<arbitrary>], iteration_bounds = array<i64: 1>, scalar_prefetch = 0 : i64, scratch_operands = 2 : i64, tpu.core_type = #tpu.core_type<tc>, window_params = [{transform_indices = @transform_0, window_bounds = array<i64: 104, 128>}, {pipeline_mode = #tpu.pipeline_mode<synchronous>, transform_indices = @transform_1, window_bounds = array<i64: 1, 1>}]} {
    %c0_i32 = arith.constant 0 : i32
    %0 = arith.cmpi eq, %arg0, %c0_i32 : i32
    %1 = arith.extui %0 : i1 to i32
    %c0_i32_0 = arith.constant 0 : i32
    %2 = arith.cmpi ne, %1, %c0_i32_0 : i32
    scf.if %2 {
      %cst_21 = arith.constant 0.000000e+00 : f32
      %55 = vector.broadcast %cst_21 : f32 to vector<128x128xf32>
      %c0_22 = arith.constant 0 : index
      %c0_23 = arith.constant 0 : index
      %56 = vector.load %arg3[%c0_22, %c0_23] : memref<128x128xf32, #tpu.memory_space<vmem>>, vector<128x128xf32>
      tpu.vector_store %arg3[%c0_22, %c0_23], %55 {strides = array<i32>} : memref<128x128xf32, #tpu.memory_space<vmem>>, vector<128x128xf32>,
      %cst_24 = arith.constant 0.000000e+00 : f32
      %57 = vector.broadcast %cst_24 : f32 to vector<1x1xf32>
      %c0_25 = arith.constant 0 : index
      %c0_26 = arith.constant 0 : index
      %58 = vector.load %arg4[%c0_25, %c0_26] : memref<1x1xf32, #tpu.memory_space<vmem>>, vector<1x1xf32>
      tpu.vector_store %arg4[%c0_25, %c0_26], %57 {strides = array<i32>} : memref<1x1xf32, #tpu.memory_space<vmem>>, vector<1x1xf32>,
      %cst_27 = arith.constant 0.000000e+00 : f32
      %59 = vector.broadcast %cst_27 : f32 to vector<1x1xf32>
      %c0_28 = arith.constant 0 : index
      %c0_29 = arith.constant 0 : index
      %60 = vector.load %arg2[%c0_28, %c0_29] : memref<1x1xf32, #tpu.memory_space<vmem>>, vector<1x1xf32>
      tpu.vector_store %arg2[%c0_28, %c0_29], %59 {strides = array<i32>} : memref<1x1xf32, #tpu.memory_space<vmem>>, vector<1x1xf32>,
    } else {
    }
    %c0 = arith.constant 0 : index
    %c0_1 = arith.constant 0 : index
    %3 = vector.load %arg1[%c0, %c0_1] : memref<104x128xf32, #tpu.memory_space<vmem>>, vector<104x128xf32>
    %c104_i32 = arith.constant 104 : i32
    %4 = arith.muli %arg0, %c104_i32 : i32
    %cst = arith.constant 5.000000e-01 : f32
    %5 = vector.broadcast %cst : f32 to vector<104x128xf32>
    %6 = arith.mulf %3, %5 : vector<104x128xf32>
    %cst_2 = arith.constant dense<0xFF800000> : vector<104xf32>
    %7 = vector.multi_reduction <maximumf>, %6, %cst_2 [1] : vector<104x128xf32> to vector<104xf32>
    %8 = vector.shape_cast %7 : vector<104xf32> to vector<104x1xf32>
    %9 = vector.broadcast %8 : vector<104x1xf32> to vector<104x128xf32>
    %10 = arith.subf %6, %9 : vector<104x128xf32>
    %11 = math.exp %10 : vector<104x128xf32>
    %cst_3 = arith.constant dense<0.000000e+00> : vector<104xf32>
    %12 = vector.multi_reduction <add>, %11, %cst_3 [1] : vector<104x128xf32> to vector<104xf32>
    %13 = vector.shape_cast %12 : vector<104xf32> to vector<104x1xf32>
    %14 = tpu.reciprocal %13 {approx = true} : vector<104x1xf32> -> vector<104x1xf32>
    %15 = arith.mulf %13, %14 : vector<104x1xf32>
    %cst_4 = arith.constant 2.000000e+00 : f32
    %16 = vector.broadcast %cst_4 : f32 to vector<104x1xf32>
    %17 = arith.subf %16, %15 : vector<104x1xf32>
    %18 = arith.mulf %14, %17 : vector<104x1xf32>
    %19 = math.log %13 : vector<104x1xf32>
    %20 = arith.mulf %11, %10 : vector<104x128xf32>
    %cst_5 = arith.constant dense<0.000000e+00> : vector<104xf32>
    %21 = vector.multi_reduction <add>, %20, %cst_5 [1] : vector<104x128xf32> to vector<104xf32>
    %22 = vector.shape_cast %21 : vector<104xf32> to vector<104x1xf32>
    %23 = arith.mulf %18, %22 : vector<104x1xf32>
    %24 = arith.subf %19, %23 : vector<104x1xf32>
    %cst_6 = arith.constant 0.000000e+00 : f32
    %25 = vector.broadcast %cst_6 : f32 to vector<104x1xf32>
    %26 = arith.subf %25, %24 : vector<104x1xf32>
    %27 = math.exp %26 : vector<104x1xf32>
    %cst_7 = arith.constant 1.000000e+00 : f32
    %28 = vector.broadcast %cst_7 : f32 to vector<104x1xf32>
    %29 = arith.addf %28, %27 : vector<104x1xf32>
    %30 = tpu.iota {dimensions = array<i32: 0>} : vector<104x1xi32>
    %31 = vector.broadcast %4 : i32 to vector<104x1xi32>
    %32 = arith.addi %31, %30 : vector<104x1xi32>
    %c100_i32 = arith.constant 100 : i32
    %33 = vector.broadcast %c100_i32 : i32 to vector<104x1xi32>
    %34 = arith.cmpi slt, %32, %33 : vector<104x1xi32>
    %cst_8 = arith.constant 0.000000e+00 : f32
    %35 = vector.broadcast %cst_8 : f32 to vector<104x1xf32>
    %36 = arith.select %34, %29, %35 : vector<104x1xi1>, vector<104x1xf32>
    %37 = arith.mulf %18, %18 : vector<104x1xf32>
    %38 = arith.mulf %36, %37 : vector<104x1xf32>
    %39 = vector.broadcast %38 : vector<104x1xf32> to vector<104x128xf32>
    %40 = arith.mulf %11, %39 : vector<104x128xf32>
    %41 = arith.truncf %40 : vector<104x128xf32> to vector<104x128xbf16>
    %42 = arith.truncf %11 : vector<104x128xf32> to vector<104x128xbf16>
    %cst_9 = arith.constant dense<0.000000e+00> : vector<128x128xf32>
    %43 = tpu.matmul %41, %42, %cst_9 {dimension_numbers = #tpu.dot_dimension_numbers<[0], [0], [1], [1], [0, 1, 1, 1], [], []>} : vector<104x128xbf16>, vector<104x128xbf16>, vector<128x128xf32> -> vector<128x128xf32>
    %cst_10 = arith.constant dense<0.000000e+00> : vector<1xf32>
    %44 = vector.multi_reduction <add>, %36, %cst_10 [0] : vector<104x1xf32> to vector<1xf32>
    %45 = vector.shape_cast %44 : vector<1xf32> to vector<1x1xf32>
    %c0_11 = arith.constant 0 : index
    %c0_12 = arith.constant 0 : index
    %46 = vector.load %arg3[%c0_11, %c0_12] : memref<128x128xf32, #tpu.memory_space<vmem>>, vector<128x128xf32>
    %47 = arith.addf %46, %43 : vector<128x128xf32>
    %c0_13 = arith.constant 0 : index
    %c0_14 = arith.constant 0 : index
    %48 = vector.load %arg3[%c0_13, %c0_14] : memref<128x128xf32, #tpu.memory_space<vmem>>, vector<128x128xf32>
    tpu.vector_store %arg3[%c0_13, %c0_14], %47 {strides = array<i32>} : memref<128x128xf32, #tpu.memory_space<vmem>>, vector<128x128xf32>,
    %c0_15 = arith.constant 0 : index
    %c0_16 = arith.constant 0 : index
    %49 = vector.load %arg4[%c0_15, %c0_16] : memref<1x1xf32, #tpu.memory_space<vmem>>, vector<1x1xf32>
    %50 = arith.addf %49, %45 : vector<1x1xf32>
    %c0_17 = arith.constant 0 : index
    %c0_18 = arith.constant 0 : index
    %51 = vector.load %arg4[%c0_17, %c0_18] : memref<1x1xf32, #tpu.memory_space<vmem>>, vector<1x1xf32>
    tpu.vector_store %arg4[%c0_17, %c0_18], %50 {strides = array<i32>} : memref<1x1xf32, #tpu.memory_space<vmem>>, vector<1x1xf32>,
    %c0_i32_19 = arith.constant 0 : i32
    %52 = arith.cmpi eq, %arg0, %c0_i32_19 : i32
    %53 = arith.extui %52 : i1 to i32
    %c0_i32_20 = arith.constant 0 : i32
    %54 = arith.cmpi ne, %53, %c0_i32_20 : i32
    scf.if %54 {
      %c0_21 = arith.constant 0 : index
      %c0_22 = arith.constant 0 : index
      %55 = vector.load %arg3[%c0_21, %c0_22] : memref<128x128xf32, #tpu.memory_space<vmem>>, vector<128x128xf32>
      %c0_23 = arith.constant 0 : index
      %c0_24 = arith.constant 0 : index
      %56 = vector.load %arg4[%c0_23, %c0_24] : memref<1x1xf32, #tpu.memory_space<vmem>>, vector<1x1xf32>
      %57 = tpu.reciprocal %56 {approx = true} : vector<1x1xf32> -> vector<1x1xf32>
      %58 = arith.mulf %56, %57 : vector<1x1xf32>
      %cst_25 = arith.constant 2.000000e+00 : f32
      %59 = vector.broadcast %cst_25 : f32 to vector<1x1xf32>
      %60 = arith.subf %59, %58 : vector<1x1xf32>
      %61 = arith.mulf %57, %60 : vector<1x1xf32>
      %cst_26 = arith.constant 1.000000e+02 : f32
      %62 = vector.broadcast %cst_26 : f32 to vector<1x1xf32>
      %63 = arith.mulf %62, %61 : vector<1x1xf32>
      %64 = vector.broadcast %63 : vector<1x1xf32> to vector<128x128xf32>
      %65 = arith.mulf %55, %64 : vector<128x128xf32>
      %cst_27 = arith.constant 1.000000e+00 : f32
      %66 = vector.broadcast %cst_27 : f32 to vector<1x128xf32>
      %cst_28 = arith.constant dense<0.000000e+00> : vector<1x128xf32>
      %67 = tpu.matmul %66, %65, %cst_28 {dimension_numbers = #tpu.dot_dimension_numbers<[1], [1], [0], [0], [0, 0, 1, 0], [], []>} : vector<1x128xf32>, vector<128x128xf32>, vector<1x128xf32> -> vector<1x128xf32>
      %cst_29 = arith.constant dense<0.000000e+00> : vector<128xf32>
      %68 = vector.multi_reduction <add>, %65, %cst_29 [0] : vector<128x128xf32> to vector<128xf32>
      %69 = vector.shape_cast %68 : vector<128xf32> to vector<1x128xf32>
      %70 = tpu.iota {dimensions = array<i32: 0>} : vector<128x128xi32>
      %71 = tpu.iota {dimensions = array<i32: 1>} : vector<128x128xi32>
      %72 = arith.cmpi eq, %70, %71 : vector<128x128xi32>
      %cst_30 = arith.constant 0.000000e+00 : f32
      %73 = vector.broadcast %cst_30 : f32 to vector<128x128xf32>
      %74 = arith.select %72, %65, %73 : vector<128x128xi1>, vector<128x128xf32>
      %cst_31 = arith.constant dense<0.000000e+00> : vector<128xf32>
      %75 = vector.multi_reduction <add>, %74, %cst_31 [0] : vector<128x128xf32> to vector<128xf32>
      %76 = vector.shape_cast %75 : vector<128xf32> to vector<1x128xf32>
      %77 = tpu.iota {dimensions = array<i32: 1>} : vector<1x128xi32>
      %c40_i32 = arith.constant 40 : i32
      %78 = vector.broadcast %c40_i32 : i32 to vector<1x128xi32>
      %79 = arith.cmpi slt, %77, %78 : vector<1x128xi32>
      %cst_32 = arith.constant 1.000000e+00 : f32
      %80 = vector.broadcast %cst_32 : f32 to vector<1x128xf32>
      %81 = arith.select %79, %67, %80 : vector<1x128xi1>, vector<1x128xf32>
      %82 = arith.subf %69, %76 : vector<1x128xf32>
      %83 = tpu.reciprocal %81 {approx = true} : vector<1x128xf32> -> vector<1x128xf32>
      %84 = arith.mulf %81, %83 : vector<1x128xf32>
      %cst_33 = arith.constant 2.000000e+00 : f32
      %85 = vector.broadcast %cst_33 : f32 to vector<1x128xf32>
      %86 = arith.subf %85, %84 : vector<1x128xf32>
      %87 = arith.mulf %83, %86 : vector<1x128xf32>
      %88 = arith.mulf %82, %87 : vector<1x128xf32>
      %cst_34 = arith.constant 0.000000e+00 : f32
      %89 = vector.broadcast %cst_34 : f32 to vector<1x128xf32>
      %90 = arith.select %79, %88, %89 : vector<1x128xi1>, vector<1x128xf32>
      %cst_35 = arith.constant dense<0.000000e+00> : vector<1xf32>
      %91 = vector.multi_reduction <add>, %90, %cst_35 [1] : vector<1x128xf32> to vector<1xf32>
      %92 = vector.shape_cast %91 : vector<1xf32> to vector<1x1xf32>
      %cst_36 = arith.constant 2.500000e-02 : f32
      %93 = vector.broadcast %cst_36 : f32 to vector<1x1xf32>
      %94 = arith.mulf %92, %93 : vector<1x1xf32>
      %c0_37 = arith.constant 0 : index
      %c0_38 = arith.constant 0 : index
      %95 = vector.load %arg2[%c0_37, %c0_38] : memref<1x1xf32, #tpu.memory_space<vmem>>, vector<1x1xf32>
      tpu.vector_store %arg2[%c0_37, %c0_38], %94 {strides = array<i32>} : memref<1x1xf32, #tpu.memory_space<vmem>>, vector<1x1xf32>,
    } else {
    }
    return
  }
  func.func @transform_0(%arg0: i32) -> (i32, i32) {
    %c0_i32 = arith.constant 0 : i32
    %c0_i32_0 = arith.constant 0 : i32
    return %arg0, %c0_i32 : i32, i32
  }
  func.func @transform_1(%arg0: i32) -> (i32, i32) {
    %c0_i32 = arith.constant 0 : i32
    %c0_i32_0 = arith.constant 0 : i32
    %c0_i32_1 = arith.constant 0 : i32
    return %c0_i32, %c0_i32_0 : i32, i32
  }
}

</mosaic_0001>

<llo_original>
// kernel: tpu_custom_call.1
$region0: #{tpu_custom_call.1}
  #allocation0 [shape = 'u32[]', space=smem, size = 0x4, offset = 0x4, fixed_abs, tag = 'smem constant byte address 0x4 - core index']
  #allocation1 [shape = 'u32[144,128]{1,0:T(1,128)}', space=vmem, size = 0x12000, scoped, tag = 'internal scratch']
  #allocation2 [shape = 'f32[128,128]{1,0:T(8,128)}', space=vmem, size = 0x10000, scoped, tag = 'scratch operand']
  #allocation3 [shape = 'f32[1,1]{1,0:T(1,128)}', space=vmem, size = 0x200, scoped, tag = 'scratch operand']
  %s0 = inlined_call_operand.hbm [shape: f32[104,128], index: 0, kind: input, shape index: {}]
  %s1 = inlined_call_operand.hbm [shape: f32[1,1], index: 1, kind: output, shape index: {}]
  %s2 = sld [smem:[#allocation0]]
  $region26: #{tpu_custom_call.1} parent=0
    _
  %s4 = ssub.s32 1, %s2
  %s5 = scalar_select 0, %s4, %s2
  $region1: #{tpu_custom_call.1} parent=0
    #allocation4 [shape = 'u8[53248]{0}', space=vmem, size = 0xd000, scoped, tag = 'input window, operand 0, single buffered']
    #allocation5 [shape = 's32[1]{0}', space=sflag, size = 0x4, scoped, tag = 'scoped memory for tpu_custom_call.1']
    #allocation6 [shape = 's32[1]{0}', space=sflag, size = 0x4, scoped, tag = 'scoped memory for tpu_custom_call.1']
    #allocation7 [shape = 'u8[512]{0}', space=vmem, size = 0x400, scoped, tag = 'output window, operand 0, single buffered']
    %6 = vsyncpa [#allocation5], 0
    %7 = vsyncpa [#allocation6], 0
    // Predicated region
    $region2: #{tpu_custom_call.1} parent=1 // pred_check
      _
    $region3: #{tpu_custom_call.1} parent=1 // pred_check_branch
      %9 = sbr.rel (0) target = $region5
    $region4: #{tpu_custom_call.1} parent=1 // pred_region
      %s11 = ssub.s32 1664, 1664
      %12 = vsyncadd [#allocation5], %s11
      %s13 = sshll.u32 [#allocation4], 4
      %s14 = int_to_ptr.vmem [resolvable:$true] %s13
      %19 = dma.hbm_to_vmem [thread:$0]  %s0, 1664, %s14, [#allocation5], 128, 128, 8
    $region5: #{tpu_custom_call.1} parent=1 // pred_fallthru
      _
    // Predicated region
    $region6: #{tpu_custom_call.1} parent=1 // pred_check
      _
    $region7: #{tpu_custom_call.1} parent=1 // pred_check_branch
      %21 = sbr.rel (0) target = $region9
    $region8: #{tpu_custom_call.1} parent=1 // pred_region
      %22 = dma.done [#allocation5], 1664
    $region9: #{tpu_custom_call.1} parent=1 // pred_fallthru
      _
    %p24 = scmp.eq.s32.totalorder 0, 0
    // Predicated region
    $region10: #{tpu_custom_call.1} parent=1 // pred_check
      %p25 = pneg %p24
    $region11: #{tpu_custom_call.1} parent=1 // pred_check_branch
      %27 = sbr.rel (%p25) target = $region13
    $region12: #{tpu_custom_call.1} parent=1 // pred_region
      %28 = vst [vmem:[#allocation2] sm:$0xff] 0.0
      %29 = vst [vmem:[#allocation2 + $0x8] sm:$0xff] 0.0
      %30 = vst [vmem:[#allocation2 + $0x10] sm:$0xff] 0.0
      %31 = vst [vmem:[#allocation2 + $0x18] sm:$0xff] 0.0
      %32 = vst [vmem:[#allocation2 + $0x20] sm:$0xff] 0.0
      %33 = vst [vmem:[#allocation2 + $0x28] sm:$0xff] 0.0
      %34 = vst [vmem:[#allocation2 + $0x30] sm:$0xff] 0.0
      %35 = vst [vmem:[#allocation2 + $0x38] sm:$0xff] 0.0
      %36 = vst [vmem:[#allocation2 + $0x40] sm:$0xff] 0.0
      %37 = vst [vmem:[#allocation2 + $0x48] sm:$0xff] 0.0
      %38 = vst [vmem:[#allocation2 + $0x50] sm:$0xff] 0.0
      %39 = vst [vmem:[#allocation2 + $0x58] sm:$0xff] 0.0
      %40 = vst [vmem:[#allocation2 + $0x60] sm:$0xff] 0.0
      %41 = vst [vmem:[#allocation2 + $0x68] sm:$0xff] 0.0
      %42 = vst [vmem:[#allocation2 + $0x70] sm:$0xff] 0.0
      %43 = vst [vmem:[#allocation2 + $0x78] sm:$0xff] 0.0
      %vm44 = vcmask 0
      %45 = vst.msk [vmem:[#allocation3] sm:$0x1] %vm44, 0.0
      %46 = vst.msk [vmem:[#allocation7] sm:$0x1] %vm44, 0.0
    $region13: #{tpu_custom_call.1} parent=1 // pred_fallthru
      _
    %v47 = vld [vmem:[#allocation4] sm:$0xff]
    %v48 = vld [vmem:[#allocation4 + $0x8] sm:$0xff]
    %v49 = vld [vmem:[#allocation4 + $0x10] sm:$0xff]
    %v50 = vld [vmem:[#allocation4 + $0x18] sm:$0xff]
    %v51 = vld [vmem:[#allocation4 + $0x20] sm:$0xff]
    %v52 = vld [vmem:[#allocation4 + $0x28] sm:$0xff]
    %v53 = vld [vmem:[#allocation4 + $0x30] sm:$0xff]
    %v54 = vld [vmem:[#allocation4 + $0x38] sm:$0xff]
    %v55 = vld [vmem:[#allocation4 + $0x40] sm:$0xff]
    %v56 = vld [vmem:[#allocation4 + $0x48] sm:$0xff]
    %v57 = vld [vmem:[#allocation4 + $0x50] sm:$0xff]
    %v58 = vld [vmem:[#allocation4 + $0x58] sm:$0xff]
    %v59 = vld [vmem:[#allocation4 + $0x60] sm:$0xff]
    %s60 = smul.u32 0, 104
    %v61 = vmul.f32 %v47, 0.5
    %v62 = vmul.f32 %v48, 0.5
    %v63 = vmul.f32 %v49, 0.5
    %v64 = vmul.f32 %v50, 0.5
    %v65 = vmul.f32 %v51, 0.5
    %v66 = vmul.f32 %v52, 0.5
    %v67 = vmul.f32 %v53, 0.5
    %v68 = vmul.f32 %v54, 0.5
    %v69 = vmul.f32 %v55, 0.5
    %v70 = vmul.f32 %v56, 0.5
    %v71 = vmul.f32 %v57, 0.5
    %v72 = vmul.f32 %v58, 0.5
    %v73 = vmul.f32 %v59, 0.5
    %74 = vmax.xlane.f32.xlu0 %v61
    %v75 = vpop.xlane.xlu0 %74
    %76 = vmax.xlane.f32.xlu0 %v62
    %v77 = vpop.xlane.xlu0 %76
    %78 = vmax.xlane.f32.xlu0 %v63
    %v79 = vpop.xlane.xlu0 %78
    %80 = vmax.xlane.f32.xlu0 %v64
    %v81 = vpop.xlane.xlu0 %80
    %82 = vmax.xlane.f32.xlu0 %v65
    %v83 = vpop.xlane.xlu0 %82
    %84 = vmax.xlane.f32.xlu0 %v66
    %v85 = vpop.xlane.xlu0 %84
    %86 = vmax.xlane.f32.xlu0 %v67
    %v87 = vpop.xlane.xlu0 %86
    %88 = vmax.xlane.f32.xlu0 %v68
    %v89 = vpop.xlane.xlu0 %88
    %90 = vmax.xlane.f32.xlu0 %v69
    %v91 = vpop.xlane.xlu0 %90
    %92 = vmax.xlane.f32.xlu0 %v70
    %v93 = vpop.xlane.xlu0 %92
    %94 = vmax.xlane.f32.xlu0 %v71
    %v95 = vpop.xlane.xlu0 %94
    %96 = vmax.xlane.f32.xlu0 %v72
    %v97 = vpop.xlane.xlu0 %96
    %98 = vmax.xlane.f32.xlu0 %v73
    %v99 = vpop.xlane.xlu0 %98
    %v100 = vsub.f32 %v61, %v75
    %v101 = vsub.f32 %v62, %v77
    %v102 = vsub.f32 %v63, %v79
    %v103 = vsub.f32 %v64, %v81
    %v104 = vsub.f32 %v65, %v83
    %v105 = vsub.f32 %v66, %v85
    %v106 = vsub.f32 %v67, %v87
    %v107 = vsub.f32 %v68, %v89
    %v108 = vsub.f32 %v69, %v91
    %v109 = vsub.f32 %v70, %v93
    %v110 = vsub.f32 %v71, %v95
    %v111 = vsub.f32 %v72, %v97
    %v112 = vsub.f32 %v73, %v99
    %v113 = vmul.f32 %v100, 1.442695
    %v114 = vpow.pop %v113
    %v115 = vmul.f32 %v101, 1.442695
    %v116 = vpow.pop %v115
    %v117 = vmul.f32 %v102, 1.442695
    %v118 = vpow.pop %v117
    %v119 = vmul.f32 %v103, 1.442695
    %v120 = vpow.pop %v119
    %v121 = vmul.f32 %v104, 1.442695
    %v122 = vpow.pop %v121
    %v123 = vmul.f32 %v105, 1.442695
    %v124 = vpow.pop %v123
    %v125 = vmul.f32 %v106, 1.442695
    %v126 = vpow.pop %v125
    %v127 = vmul.f32 %v107, 1.442695
    %v128 = vpow.pop %v127
    %v129 = vmul.f32 %v108, 1.442695
    %v130 = vpow.pop %v129
    %v131 = vmul.f32 %v109, 1.442695
    %v132 = vpow.pop %v131
    %v133 = vmul.f32 %v110, 1.442695
    %v134 = vpow.pop %v133
    %v135 = vmul.f32 %v111, 1.442695
    %v136 = vpow.pop %v135
    %v137 = vmul.f32 %v112, 1.442695
    %v138 = vpow.pop %v137
    %139 = vadd.xlane.f32.xlu0 %v114
    %v140 = vpop.xlane.xlu0 %139
    %141 = vadd.xlane.f32.xlu0 %v116
    %v142 = vpop.xlane.xlu0 %141
    %143 = vadd.xlane.f32.xlu0 %v118
    %v144 = vpop.xlane.xlu0 %143
    %145 = vadd.xlane.f32.xlu0 %v120
    %v146 = vpop.xlane.xlu0 %145
    %147 = vadd.xlane.f32.xlu0 %v122
    %v148 = vpop.xlane.xlu0 %147
    %149 = vadd.xlane.f32.xlu0 %v124
    %v150 = vpop.xlane.xlu0 %149
    %151 = vadd.xlane.f32.xlu0 %v126
    %v152 = vpop.xlane.xlu0 %151
    %153 = vadd.xlane.f32.xlu0 %v128
    %v154 = vpop.xlane.xlu0 %153
    %155 = vadd.xlane.f32.xlu0 %v130
    %v156 = vpop.xlane.xlu0 %155
    %157 = vadd.xlane.f32.xlu0 %v132
    %v158 = vpop.xlane.xlu0 %157
    %159 = vadd.xlane.f32.xlu0 %v134
    %v160 = vpop.xlane.xlu0 %159
    %161 = vadd.xlane.f32.xlu0 %v136
    %v162 = vpop.xlane.xlu0 %161
    %163 = vadd.xlane.f32.xlu0 %v138
    %v164 = vpop.xlane.xlu0 %163
    %v165 = vrcp.pop %v140
    %v166 = vrcp.pop %v142
    %v167 = vrcp.pop %v144
    %v168 = vrcp.pop %v146
    %v169 = vrcp.pop %v148
    %v170 = vrcp.pop %v150
    %v171 = vrcp.pop %v152
    %v172 = vrcp.pop %v154
    %v173 = vrcp.pop %v156
    %v174 = vrcp.pop %v158
    %v175 = vrcp.pop %v160
    %v176 = vrcp.pop %v162
    %v177 = vrcp.pop %v164
    %v178 = vmul.f32 %v140, %v165
    %v179 = vmul.f32 %v142, %v166
    %v180 = vmul.f32 %v144, %v167
    %v181 = vmul.f32 %v146, %v168
    %v182 = vmul.f32 %v148, %v169
    %v183 = vmul.f32 %v150, %v170
    %v184 = vmul.f32 %v152, %v171
    %v185 = vmul.f32 %v154, %v172
    %v186 = vmul.f32 %v156, %v173
    %v187 = vmul.f32 %v158, %v174
    %v188 = vmul.f32 %v160, %v175
    %v189 = vmul.f32 %v162, %v176
    %v190 = vmul.f32 %v164, %v177
    %v191 = vsub.f32 2.0, %v178
    %v192 = vsub.f32 2.0, %v179
    %v193 = vsub.f32 2.0, %v180
    %v194 = vsub.f32 2.0, %v181
    %v195 = vsub.f32 2.0, %v182
    %v196 = vsub.f32 2.0, %v183
    %v197 = vsub.f32 2.0, %v184
    %v198 = vsub.f32 2.0, %v185
    %v199 = vsub.f32 2.0, %v186
    %v200 = vsub.f32 2.0, %v187
    %v201 = vsub.f32 2.0, %v188
    %v202 = vsub.f32 2.0, %v189
    %v203 = vsub.f32 2.0, %v190
    %v204 = vmul.f32 %v165, %v191
    %v205 = vmul.f32 %v166, %v192
    %v206 = vmul.f32 %v167, %v193
    %v207 = vmul.f32 %v168, %v194
    %v208 = vmul.f32 %v169, %v195
    %v209 = vmul.f32 %v170, %v196
    %v210 = vmul.f32 %v171, %v197
    %v211 = vmul.f32 %v172, %v198
    %v212 = vmul.f32 %v173, %v199
    %v213 = vmul.f32 %v174, %v200
    %v214 = vmul.f32 %v175, %v201
    %v215 = vmul.f32 %v176, %v202
    %v216 = vmul.f32 %v177, %v203
    %v217 = vlog2.pop %v140
    %v218 = vmul.f32 %v217, 0.6931472
    %v219 = vlog2.pop %v142
    %v220 = vmul.f32 %v219, 0.6931472
    %v221 = vlog2.pop %v144
    %v222 = vmul.f32 %v221, 0.6931472
    %v223 = vlog2.pop %v146
    %v224 = vmul.f32 %v223, 0.6931472
    %v225 = vlog2.pop %v148
    %v226 = vmul.f32 %v225, 0.6931472
    %v227 = vlog2.pop %v150
    %v228 = vmul.f32 %v227, 0.6931472
    %v229 = vlog2.pop %v152
    %v230 = vmul.f32 %v229, 0.6931472
    %v231 = vlog2.pop %v154
    %v232 = vmul.f32 %v231, 0.6931472
    %v233 = vlog2.pop %v156
    %v234 = vmul.f32 %v233, 0.6931472
    %v235 = vlog2.pop %v158
    %v236 = vmul.f32 %v235, 0.6931472
    %v237 = vlog2.pop %v160
    %v238 = vmul.f32 %v237, 0.6931472
    %v239 = vlog2.pop %v162
    %v240 = vmul.f32 %v239, 0.6931472
    %v241 = vlog2.pop %v164
    %v242 = vmul.f32 %v241, 0.6931472
    %v243 = vmul.f32 %v114, %v100
    %v244 = vmul.f32 %v116, %v101
    %v245 = vmul.f32 %v118, %v102
    %v246 = vmul.f32 %v120, %v103
    %v247 = vmul.f32 %v122, %v104
    %v248 = vmul.f32 %v124, %v105
    %v249 = vmul.f32 %v126, %v106
    %v250 = vmul.f32 %v128, %v107
    %v251 = vmul.f32 %v130, %v108
    %v252 = vmul.f32 %v132, %v109
    %v253 = vmul.f32 %v134, %v110
    %v254 = vmul.f32 %v136, %v111
    %v255 = vmul.f32 %v138, %v112
    %256 = vadd.xlane.f32.xlu0 %v243
    %v257 = vpop.xlane.xlu0 %256
    %258 = vadd.xlane.f32.xlu0 %v244
    %v259 = vpop.xlane.xlu0 %258
    %260 = vadd.xlane.f32.xlu0 %v245
    %v261 = vpop.xlane.xlu0 %260
    %262 = vadd.xlane.f32.xlu0 %v246
    %v263 = vpop.xlane.xlu0 %262
    %264 = vadd.xlane.f32.xlu0 %v247
    %v265 = vpop.xlane.xlu0 %264
    %266 = vadd.xlane.f32.xlu0 %v248
    %v267 = vpop.xlane.xlu0 %266
    %268 = vadd.xlane.f32.xlu0 %v249
    %v269 = vpop.xlane.xlu0 %268
    %270 = vadd.xlane.f32.xlu0 %v250
    %v271 = vpop.xlane.xlu0 %270
    %272 = vadd.xlane.f32.xlu0 %v251
    %v273 = vpop.xlane.xlu0 %272
    %274 = vadd.xlane.f32.xlu0 %v252
    %v275 = vpop.xlane.xlu0 %274
    %276 = vadd.xlane.f32.xlu0 %v253
    %v277 = vpop.xlane.xlu0 %276
    %278 = vadd.xlane.f32.xlu0 %v254
    %v279 = vpop.xlane.xlu0 %278
    %280 = vadd.xlane.f32.xlu0 %v255
    %v281 = vpop.xlane.xlu0 %280
    %v282 = vmul.f32 %v204, %v257
    %v283 = vmul.f32 %v205, %v259
    %v284 = vmul.f32 %v206, %v261
    %v285 = vmul.f32 %v207, %v263
    %v286 = vmul.f32 %v208, %v265
    %v287 = vmul.f32 %v209, %v267
    %v288 = vmul.f32 %v210, %v269
    %v289 = vmul.f32 %v211, %v271
    %v290 = vmul.f32 %v212, %v273
    %v291 = vmul.f32 %v213, %v275
    %v292 = vmul.f32 %v214, %v277
    %v293 = vmul.f32 %v215, %v279
    %v294 = vmul.f32 %v216, %v281
    %v295 = vsub.f32 %v218, %v282
    %v296 = vsub.f32 %v220, %v283
    %v297 = vsub.f32 %v222, %v284
    %v298 = vsub.f32 %v224, %v285
    %v299 = vsub.f32 %v226, %v286
    %v300 = vsub.f32 %v228, %v287
    %v301 = vsub.f32 %v230, %v288
    %v302 = vsub.f32 %v232, %v289
    %v303 = vsub.f32 %v234, %v290
    %v304 = vsub.f32 %v236, %v291
    %v305 = vsub.f32 %v238, %v292
    %v306 = vsub.f32 %v240, %v293
    %v307 = vsub.f32 %v242, %v294
    %v308 = vsub.f32 0.0, %v295
    %v309 = vsub.f32 0.0, %v296
    %v310 = vsub.f32 0.0, %v297
    %v311 = vsub.f32 0.0, %v298
    %v312 = vsub.f32 0.0, %v299
    %v313 = vsub.f32 0.0, %v300
    %v314 = vsub.f32 0.0, %v301
    %v315 = vsub.f32 0.0, %v302
    %v316 = vsub.f32 0.0, %v303
    %v317 = vsub.f32 0.0, %v304
    %v318 = vsub.f32 0.0, %v305
    %v319 = vsub.f32 0.0, %v306
    %v320 = vsub.f32 0.0, %v307
    %v321 = vmul.f32 %v308, 1.442695
    %v322 = vpow.pop %v321
    %v323 = vmul.f32 %v309, 1.442695
    %v324 = vpow.pop %v323
    %v325 = vmul.f32 %v310, 1.442695
    %v326 = vpow.pop %v325
    %v327 = vmul.f32 %v311, 1.442695
    %v328 = vpow.pop %v327
    %v329 = vmul.f32 %v312, 1.442695
    %v330 = vpow.pop %v329
    %v331 = vmul.f32 %v313, 1.442695
    %v332 = vpow.pop %v331
    %v333 = vmul.f32 %v314, 1.442695
    %v334 = vpow.pop %v333
    %v335 = vmul.f32 %v315, 1.442695
    %v336 = vpow.pop %v335
    %v337 = vmul.f32 %v316, 1.442695
    %v338 = vpow.pop %v337
    %v339 = vmul.f32 %v317, 1.442695
    %v340 = vpow.pop %v339
    %v341 = vmul.f32 %v318, 1.442695
    %v342 = vpow.pop %v341
    %v343 = vmul.f32 %v319, 1.442695
    %v344 = vpow.pop %v343
    %v345 = vmul.f32 %v320, 1.442695
    %v346 = vpow.pop %v345
    %v347 = vadd.f32 %v322, 1.0
    %v348 = vadd.f32 %v324, 1.0
    %v349 = vadd.f32 %v326, 1.0
    %v350 = vadd.f32 %v328, 1.0
    %v351 = vadd.f32 %v330, 1.0
    %v352 = vadd.f32 %v332, 1.0
    %v353 = vadd.f32 %v334, 1.0
    %v354 = vadd.f32 %v336, 1.0
    %v355 = vadd.f32 %v338, 1.0
    %v356 = vadd.f32 %v340, 1.0
    %v357 = vadd.f32 %v342, 1.0
    %v358 = vadd.f32 %v344, 1.0
    %v359 = vadd.f32 %v346, 1.0
    %v360 = vlaneseq
    %v361 = vshrl.u32 %v360, 7
    %v362 = vadd.s32 %v361, 8
    %v363 = vadd.s32 %v361, 16
    %v364 = vadd.s32 %v361, 24
    %v365 = vadd.s32 %v361, 32
    %v366 = vadd.s32 %v361, 40
    %v367 = vadd.s32 %v361, 48
    %v368 = vadd.s32 %v361, 56
    %v369 = vadd.s32 %v361, 64
    %v370 = vadd.s32 %v361, 72
    %v371 = vadd.s32 %v361, 80
    %v372 = vadd.s32 %v361, 88
    %v373 = vadd.s32 %v361, 96
    %v374 = vstv %s60
    %v375 = vadd.s32 %v374, %v361
    %v376 = vadd.s32 %v374, %v362
    %v377 = vadd.s32 %v374, %v363
    %v378 = vadd.s32 %v374, %v364
    %v379 = vadd.s32 %v374, %v365
    %v380 = vadd.s32 %v374, %v366
    %v381 = vadd.s32 %v374, %v367
    %v382 = vadd.s32 %v374, %v368
    %v383 = vadd.s32 %v374, %v369
    %v384 = vadd.s32 %v374, %v370
    %v385 = vadd.s32 %v374, %v371
    %v386 = vadd.s32 %v374, %v372
    %v387 = vadd.s32 %v374, %v373
    %vm388 = vcmp.lt.s32.totalorder %v375, 100
    %vm389 = vcmp.lt.s32.totalorder %v376, 100
    %vm390 = vcmp.lt.s32.totalorder %v377, 100
    %vm391 = vcmp.lt.s32.totalorder %v378, 100
    %vm392 = vcmp.lt.s32.totalorder %v379, 100
    %vm393 = vcmp.lt.s32.totalorder %v380, 100
    %vm394 = vcmp.lt.s32.totalorder %v381, 100
    %vm395 = vcmp.lt.s32.totalorder %v382, 100
    %vm396 = vcmp.lt.s32.totalorder %v383, 100
    %vm397 = vcmp.lt.s32.totalorder %v384, 100
    %vm398 = vcmp.lt.s32.totalorder %v385, 100
    %vm399 = vcmp.lt.s32.totalorder %v386, 100
    %vm400 = vcmp.lt.s32.totalorder %v387, 100
    %v401 = vsel %vm388, %v347, 0.0
    %v402 = vsel %vm389, %v348, 0.0
    %v403 = vsel %vm390, %v349, 0.0
    %v404 = vsel %vm391, %v350, 0.0
    %v405 = vsel %vm392, %v351, 0.0
    %v406 = vsel %vm393, %v352, 0.0
    %v407 = vsel %vm394, %v353, 0.0
    %v408 = vsel %vm395, %v354, 0.0
    %v409 = vsel %vm396, %v355, 0.0
    %v410 = vsel %vm397, %v356, 0.0
    %v411 = vsel %vm398, %v357, 0.0
    %v412 = vsel %vm399, %v358, 0.0
    %v413 = vsel %vm400, %v359, 0.0
    %v414 = vmul.f32 %v204, %v204
    %v415 = vmul.f32 %v205, %v205
    %v416 = vmul.f32 %v206, %v206
    %v417 = vmul.f32 %v207, %v207
    %v418 = vmul.f32 %v208, %v208
    %v419 = vmul.f32 %v209, %v209
    %v420 = vmul.f32 %v210, %v210
    %v421 = vmul.f32 %v211, %v211
    %v422 = vmul.f32 %v212, %v212
    %v423 = vmul.f32 %v213, %v213
    %v424 = vmul.f32 %v214, %v214
    %v425 = vmul.f32 %v215, %v215
    %v426 = vmul.f32 %v216, %v216
    %v427 = vmul.f32 %v401, %v414
    %v428 = vmul.f32 %v402, %v415
    %v429 = vmul.f32 %v403, %v416
    %v430 = vmul.f32 %v404, %v417
    %v431 = vmul.f32 %v405, %v418
    %v432 = vmul.f32 %v406, %v419
    %v433 = vmul.f32 %v407, %v420
    %v434 = vmul.f32 %v408, %v421
    %v435 = vmul.f32 %v409, %v422
    %v436 = vmul.f32 %v410, %v423
    %v437 = vmul.f32 %v411, %v424
    %v438 = vmul.f32 %v412, %v425
    %v439 = vmul.f32 %v413, %v426
    %v440 = vmul.f32 %v114, %v427
    %v441 = vmul.f32 %v116, %v428
    %v442 = vmul.f32 %v118, %v429
    %v443 = vmul.f32 %v120, %v430
    %v444 = vmul.f32 %v122, %v431
    %v445 = vmul.f32 %v124, %v432
    %v446 = vmul.f32 %v126, %v433
    %v447 = vmul.f32 %v128, %v434
    %v448 = vmul.f32 %v130, %v435
    %v449 = vmul.f32 %v132, %v436
    %v450 = vmul.f32 %v134, %v437
    %v451 = vmul.f32 %v136, %v438
    %v452 = vmul.f32 %v138, %v439
    %v453 = vpack.c.bf16 %v441, %v440
    %v454 = vpack.c.bf16 %v443, %v442
    %v455 = vpack.c.bf16 %v445, %v444
    %v456 = vpack.c.bf16 %v447, %v446
    %v457 = vpack.c.bf16 %v449, %v448
    %v458 = vpack.c.bf16 %v451, %v450
    %v459 = vpack.c.bf16 %v452, %v452
    %v460 = vpack.c.bf16 %v116, %v114
    %v461 = vpack.c.bf16 %v120, %v118
    %v462 = vpack.c.bf16 %v124, %v122
    %v463 = vpack.c.bf16 %v128, %v126
    %v464 = vpack.c.bf16 %v132, %v130
    %v465 = vpack.c.bf16 %v136, %v134
    %v466 = vpack.c.bf16 %v138, %v138
    %467 = vxpose.xlu0.c.b16.start [1/8] %v453, 128
    %468 = vxpose.xlu0.c.b16.cont [2/8] %v454, 128
    %469 = vxpose.xlu0.c.b16.cont [3/8] %v455, 128
    %470 = vxpose.xlu0.c.b16.cont [4/8] %v456, 128
    %471 = vxpose.xlu0.c.b16.cont [5/8] %v457, 128
    %472 = vxpose.xlu0.c.b16.cont [6/8] %v458, 128
    %473 = vxpose.xlu0.c.b16.cont [7/8] %v459, 128
    %474 = vxpose.xlu0.c.b16.end [8/8] 0, 128
    %v475 = vpop.trf.xlu0
    %v476 = vpop.trf.xlu0
    %v477 = vpop.trf.xlu0
    %v478 = vpop.trf.xlu0
    %v479 = vpop.trf.xlu0
    %v480 = vpop.trf.xlu0
    %v481 = vpop.trf.xlu0
    %v482 = vpop.trf.xlu0
    %vm483 = vcmask 850944
    %v485 = vsel %vm483, %v475, 0
    %v488 = vsel %vm483, %v476, 0
    %v491 = vsel %vm483, %v477, 0
    %v494 = vsel %vm483, %v478, 0
    %v497 = vsel %vm483, %v479, 0
    %v500 = vsel %vm483, %v480, 0
    %v503 = vsel %vm483, %v481, 0
    %v506 = vsel %vm483, %v482, 0
    %vm508 = vcmask 1043456
    %v510 = vsel %vm508, %v466, 0
    %512 = vmatprep.subr.bf16.mxu0 0
    %513 = vmatpush1.bf16.msra.mxu0 %v460
    %514 = vmatprep.subr.bf16.mxu0 0
    %515 = vmatpush1.bf16.msra.mxu0 %v461
    %516 = vmatprep.subr.bf16.mxu0 0
    %517 = vmatpush1.bf16.msra.mxu0 %v462
    %518 = vmatprep.subr.bf16.mxu0 0
    %519 = vmatpush1.bf16.msra.mxu0 %v463
    %520 = vmatprep.subr.bf16.mxu0 0
    %521 = vmatpush1.bf16.msra.mxu0 %v464
    %522 = vmatprep.subr.bf16.mxu0 0
    %523 = vmatpush1.bf16.msra.mxu0 %v465
    %524 = vmatprep.subr.bf16.mxu0 0
    %525 = vmatpush1.bf16.msra.mxu0 %v510
    %526 = vmatprep.subr.bf16.mxu0 0
    %527 = vmatpush1.bf16.msra.mxu0 0
    %528 = vmatprep.subr.bf16.mxu0 0
    %529 = vmatpush1.bf16.msra.mxu0 0
    %530 = vmatprep.subr.bf16.mxu0 0
    %531 = vmatpush1.bf16.msra.mxu0 0
    %532 = vmatprep.subr.bf16.mxu0 0
    %533 = vmatpush1.bf16.msra.mxu0 0
    %534 = vmatprep.subr.bf16.mxu0 0
    %535 = vmatpush1.bf16.msra.mxu0 0
    %536 = vmatprep.subr.bf16.mxu0 0
    %537 = vmatpush1.bf16.msra.mxu0 0
    %538 = vmatprep.subr.bf16.mxu0 0
    %539 = vmatpush1.bf16.msra.mxu0 0
    %540 = vmatprep.subr.bf16.mxu0 0
    %541 = vmatpush1.bf16.msra.mxu0 0
    %542 = vmatprep.subr.bf16.mxu0 0
    %543 = vmatpush1.bf16.msra.mxu0 0
    %544 = vmatprep.mubr.bf16.mxu0 0
    %545 = vmatmul.mubr.bf16.gmra.mrb[0].mxu0 %v485
    %v546 = vpop.f32.mrb[0].mxu0
    %v547 = vadd.f32 0.0, %v546
    %v548 = vpop.f32.mrb[0].mxu0
    %v549 = vpop.f32.mrb[0].mxu0
    %v550 = vadd.f32 0.0, %v549
    %v551 = vpop.f32.mrb[0].mxu0
    %552 = vmatprep.mubr.bf16.mxu0 0
    %553 = vmatmul.mubr.bf16.gmra.mrb[0].mxu0 %v488
    %v554 = vpop.f32.mrb[0].mxu0
    %v555 = vadd.f32 0.0, %v554
    %v556 = vpop.f32.mrb[0].mxu0
    %v557 = vpop.f32.mrb[0].mxu0
    %v558 = vadd.f32 0.0, %v557
    %v559 = vpop.f32.mrb[0].mxu0
    %560 = vmatprep.mubr.bf16.mxu0 0
    %561 = vmatmul.mubr.bf16.gmra.mrb[0].mxu0 %v491
    %v562 = vpop.f32.mrb[0].mxu0
    %v563 = vadd.f32 0.0, %v562
    %v564 = vpop.f32.mrb[0].mxu0
    %v565 = vpop.f32.mrb[0].mxu0
    %v566 = vadd.f32 0.0, %v565
    %v567 = vpop.f32.mrb[0].mxu0
    %568 = vmatprep.mubr.bf16.mxu0 0
    %569 = vmatmul.mubr.bf16.gmra.mrb[0].mxu0 %v494
    %v570 = vpop.f32.mrb[0].mxu0
    %v571 = vadd.f32 0.0, %v570
    %v572 = vpop.f32.mrb[0].mxu0
    %v573 = vpop.f32.mrb[0].mxu0
    %v574 = vadd.f32 0.0, %v573
    %v575 = vpop.f32.mrb[0].mxu0
    %576 = vmatprep.mubr.bf16.mxu0 0
    %577 = vmatmul.mubr.bf16.gmra.mrb[0].mxu0 %v497
    %v578 = vpop.f32.mrb[0].mxu0
    %v579 = vadd.f32 0.0, %v578
    %v580 = vpop.f32.mrb[0].mxu0
    %v581 = vpop.f32.mrb[0].mxu0
    %v582 = vadd.f32 0.0, %v581
    %v583 = vpop.f32.mrb[0].mxu0
    %584 = vmatprep.mubr.bf16.mxu0 0
    %585 = vmatmul.mubr.bf16.gmra.mrb[0].mxu0 %v500
    %v586 = vpop.f32.mrb[0].mxu0
    %v587 = vadd.f32 0.0, %v586
    %v588 = vpop.f32.mrb[0].mxu0
    %v589 = vpop.f32.mrb[0].mxu0
    %v590 = vadd.f32 0.0, %v589
    %v591 = vpop.f32.mrb[0].mxu0
    %592 = vmatprep.mubr.bf16.mxu0 0
    %593 = vmatmul.mubr.bf16.gmra.mrb[0].mxu0 %v503
    %v594 = vpop.f32.mrb[0].mxu0
    %v595 = vadd.f32 0.0, %v594
    %v596 = vpop.f32.mrb[0].mxu0
    %v597 = vpop.f32.mrb[0].mxu0
    %v598 = vadd.f32 0.0, %v597
    %v599 = vpop.f32.mrb[0].mxu0
    %600 = vmatprep.mubr.bf16.mxu0 0
    %601 = vmatmul.mubr.bf16.gmra.mrb[0].mxu0 %v506
    %v602 = vpop.f32.mrb[0].mxu0
    %v603 = vadd.f32 0.0, %v602
    %v604 = vpop.f32.mrb[0].mxu0
    %v605 = vpop.f32.mrb[0].mxu0
    %v606 = vadd.f32 0.0, %v605
    %v607 = vpop.f32.mrb[0].mxu0
    %608 = vdwg.mxu0
    %v609 = vadd.f32 %v401, %v402
    %v610 = vadd.f32 %v609, %v403
    %v611 = vadd.f32 %v610, %v404
    %v612 = vadd.f32 %v611, %v405
    %v613 = vadd.f32 %v612, %v406
    %v614 = vadd.f32 %v613, %v407
    %v615 = vadd.f32 %v614, %v408
    %v616 = vadd.f32 %v615, %v409
    %v617 = vadd.f32 %v616, %v410
    %v618 = vadd.f32 %v617, %v411
    %v619 = vadd.f32 %v618, %v412
    %v620 = vadd.f32 %v619, %v413
    %v621 = vrot.slane %v620, 4
    %v622 = vadd.f32 %v620, %v621
    %v623 = vrot.slane %v622, 2
    %v624 = vadd.f32 %v622, %v623
    %v625 = vrot.slane %v624, 1
    %v626 = vadd.f32 %v624, %v625
    %v627 = vld [vmem:[#allocation2] sm:$0xff]
    %v628 = vld [vmem:[#allocation2 + $0x8] sm:$0xff]
    %v629 = vld [vmem:[#allocation2 + $0x10] sm:$0xff]
    %v630 = vld [vmem:[#allocation2 + $0x18] sm:$0xff]
    %v631 = vld [vmem:[#allocation2 + $0x20] sm:$0xff]
    %v632 = vld [vmem:[#allocation2 + $0x28] sm:$0xff]
    %v633 = vld [vmem:[#allocation2 + $0x30] sm:$0xff]
    %v634 = vld [vmem:[#allocation2 + $0x38] sm:$0xff]
    %v635 = vld [vmem:[#allocation2 + $0x40] sm:$0xff]
    %v636 = vld [vmem:[#allocation2 + $0x48] sm:$0xff]
    %v637 = vld [vmem:[#allocation2 + $0x50] sm:$0xff]
    %v638 = vld [vmem:[#allocation2 + $0x58] sm:$0xff]
    %v639 = vld [vmem:[#allocation2 + $0x60] sm:$0xff]
    %v640 = vld [vmem:[#allocation2 + $0x68] sm:$0xff]
    %v641 = vld [vmem:[#allocation2 + $0x70] sm:$0xff]
    %v642 = vld [vmem:[#allocation2 + $0x78] sm:$0xff]
    %v643 = vadd.f32 %v627, %v547
    %v644 = vadd.f32 %v628, %v550
    %v645 = vadd.f32 %v629, %v555
    %v646 = vadd.f32 %v630, %v558
    %v647 = vadd.f32 %v631, %v563
    %v648 = vadd.f32 %v632, %v566
    %v649 = vadd.f32 %v633, %v571
    %v650 = vadd.f32 %v634, %v574
    %v651 = vadd.f32 %v635, %v579
    %v652 = vadd.f32 %v636, %v582
    %v653 = vadd.f32 %v637, %v587
    %v654 = vadd.f32 %v638, %v590
    %v655 = vadd.f32 %v639, %v595
    %v656 = vadd.f32 %v640, %v598
    %v657 = vadd.f32 %v641, %v603
    %v658 = vadd.f32 %v642, %v606
    %659 = vst [vmem:[#allocation2] sm:$0xff] %v643
    %660 = vst [vmem:[#allocation2 + $0x8] sm:$0xff] %v644
    %661 = vst [vmem:[#allocation2 + $0x10] sm:$0xff] %v645
    %662 = vst [vmem:[#allocation2 + $0x18] sm:$0xff] %v646
    %663 = vst [vmem:[#allocation2 + $0x20] sm:$0xff] %v647
    %664 = vst [vmem:[#allocation2 + $0x28] sm:$0xff] %v648
    %665 = vst [vmem:[#allocation2 + $0x30] sm:$0xff] %v649
    %666 = vst [vmem:[#allocation2 + $0x38] sm:$0xff] %v650
    %667 = vst [vmem:[#allocation2 + $0x40] sm:$0xff] %v651
    %668 = vst [vmem:[#allocation2 + $0x48] sm:$0xff] %v652
    %669 = vst [vmem:[#allocation2 + $0x50] sm:$0xff] %v653
    %670 = vst [vmem:[#allocation2 + $0x58] sm:$0xff] %v654
    %671 = vst [vmem:[#allocation2 + $0x60] sm:$0xff] %v655
    %672 = vst [vmem:[#allocation2 + $0x68] sm:$0xff] %v656
    %673 = vst [vmem:[#allocation2 + $0x70] sm:$0xff] %v657
    %674 = vst [vmem:[#allocation2 + $0x78] sm:$0xff] %v658
    %v675 = vld [vmem:[#allocation3] sm:$0x1]
    %v676 = vadd.f32 %v675, %v626
    %vm677 = vcmask 0
    %678 = vst.msk [vmem:[#allocation3] sm:$0x1] %vm677, %v676
    // Predicated region
    $region14: #{tpu_custom_call.1} parent=1 // pred_check
      %p679 = pneg %p24
    $region15: #{tpu_custom_call.1} parent=1 // pred_check_branch
      %681 = sbr.rel (%p679) target = $region17
    $region16: #{tpu_custom_call.1} parent=1 // pred_region
      %v682 = vld [vmem:[#allocation2] sm:$0xff]
      %v683 = vld [vmem:[#allocation2 + $0x8] sm:$0xff]
      %v684 = vld [vmem:[#allocation2 + $0x10] sm:$0xff]
      %v685 = vld [vmem:[#allocation2 + $0x18] sm:$0xff]
      %v686 = vld [vmem:[#allocation2 + $0x20] sm:$0xff]
      %v687 = vld [vmem:[#allocation2 + $0x28] sm:$0xff]
      %v688 = vld [vmem:[#allocation2 + $0x30] sm:$0xff]
      %v689 = vld [vmem:[#allocation2 + $0x38] sm:$0xff]
      %v690 = vld [vmem:[#allocation2 + $0x40] sm:$0xff]
      %v691 = vld [vmem:[#allocation2 + $0x48] sm:$0xff]
      %v692 = vld [vmem:[#allocation2 + $0x50] sm:$0xff]
      %v693 = vld [vmem:[#allocation2 + $0x58] sm:$0xff]
      %v694 = vld [vmem:[#allocation2 + $0x60] sm:$0xff]
      %v695 = vld [vmem:[#allocation2 + $0x68] sm:$0xff]
      %v696 = vld [vmem:[#allocation2 + $0x70] sm:$0xff]
      %v697 = vld [vmem:[#allocation2 + $0x78] sm:$0xff]
      %v698 = vld [vmem:[#allocation3] sm:$0x1]
      %v699 = vrcp.pop %v698
      %v700 = vmul.f32 %v698, %v699
      %v701 = vsub.f32 2.0, %v700
      %v702 = vmul.f32 %v699, %v701
      %v703 = vmul.f32 %v702, 100.0
      %v705 = vlaneseq
      %v706 = vshrl.u32 %v705, 7
      %v707 = vsub.s32 0, %v706
      %v708 = vrot.slane %v703, %v707
      %709 = vset.pattern.permute.xlu0 0
      %710 = vperm.xlu0 %709, %v708
      %v711 = vpop.permute.xlu0 %710
      %v713 = vmul.f32 %v682, %v711
      %v714 = vmul.f32 %v683, %v711
      %v715 = vmul.f32 %v684, %v711
      %v716 = vmul.f32 %v685, %v711
      %v717 = vmul.f32 %v686, %v711
      %v718 = vmul.f32 %v687, %v711
      %v719 = vmul.f32 %v688, %v711
      %v720 = vmul.f32 %v689, %v711
      %v721 = vmul.f32 %v690, %v711
      %v722 = vmul.f32 %v691, %v711
      %v723 = vmul.f32 %v692, %v711
      %v724 = vmul.f32 %v693, %v711
      %v725 = vmul.f32 %v694, %v711
      %v726 = vmul.f32 %v695, %v711
      %v727 = vmul.f32 %v696, %v711
      %v728 = vmul.f32 %v697, %v711
      %729 = vmatprep.subr.mxu0 0.0
      %730 = vmatpush1.xpose.msra.mxu0 %v713
      %731 = vmatprep.subr.mxu0 0.0
      %732 = vmatpush1.xpose.msra.mxu0 %v714
      %733 = vmatprep.subr.mxu0 0.0
      %734 = vmatpush1.xpose.msra.mxu0 %v715
      %735 = vmatprep.subr.mxu0 0.0
      %736 = vmatpush1.xpose.msra.mxu0 %v716
      %737 = vmatprep.subr.mxu0 0.0
      %738 = vmatpush1.xpose.msra.mxu0 %v717
      %739 = vmatprep.subr.mxu0 0.0
      %740 = vmatpush1.xpose.msra.mxu0 %v718
      %741 = vmatprep.subr.mxu0 0.0
      %742 = vmatpush1.xpose.msra.mxu0 %v719
      %743 = vmatprep.subr.mxu0 0.0
      %744 = vmatpush1.xpose.msra.mxu0 %v720
      %745 = vmatprep.subr.mxu0 0.0
      %746 = vmatpush1.xpose.msra.mxu0 %v721
      %747 = vmatprep.subr.mxu0 0.0
      %748 = vmatpush1.xpose.msra.mxu0 %v722
      %749 = vmatprep.subr.mxu0 0.0
      %750 = vmatpush1.xpose.msra.mxu0 %v723
      %751 = vmatprep.subr.mxu0 0.0
      %752 = vmatpush1.xpose.msra.mxu0 %v724
      %753 = vmatprep.subr.mxu0 0.0
      %754 = vmatpush1.xpose.msra.mxu0 %v725
      %755 = vmatprep.subr.mxu0 0.0
      %756 = vmatpush1.xpose.msra.mxu0 %v726
      %757 = vmatprep.subr.mxu0 0.0
      %758 = vmatpush1.xpose.msra.mxu0 %v727
      %759 = vmatprep.subr.mxu0 0.0
      %760 = vmatpush1.xpose.msra.mxu0 %v728
      %761 = vmatprep.subr.mxu0 0.0
      %762 = vmatpush1.xpose.msra.mxu0 0.0
      %763 = vmatprep.subr.mxu0 0.0
      %764 = vmatpush1.xpose.msra.mxu0 0.0
      %765 = vmatprep.subr.mxu0 0.0
      %766 = vmatpush1.xpose.msra.mxu0 0.0
      %767 = vmatprep.subr.mxu0 0.0
      %768 = vmatpush1.xpose.msra.mxu0 0.0
      %769 = vmatprep.subr.mxu0 0.0
      %770 = vmatpush1.xpose.msra.mxu0 0.0
      %771 = vmatprep.subr.mxu0 0.0
      %772 = vmatpush1.xpose.msra.mxu0 0.0
      %773 = vmatprep.subr.mxu0 0.0
      %774 = vmatpush1.xpose.msra.mxu0 0.0
      %775 = vmatprep.subr.mxu0 0.0
      %776 = vmatpush1.xpose.msra.mxu0 0.0
      %777 = vmatprep.subr.mxu0 0.0
      %778 = vmatpush1.xpose.msra.mxu0 0.0
      %779 = vmatprep.subr.mxu0 0.0
      %780 = vmatpush1.xpose.msra.mxu0 0.0
      %781 = vmatprep.subr.mxu0 0.0
      %782 = vmatpush1.xpose.msra.mxu0 0.0
      %783 = vmatprep.subr.mxu0 0.0
      %784 = vmatpush1.xpose.msra.mxu0 0.0
      %785 = vmatprep.subr.mxu0 0.0
      %786 = vmatpush1.xpose.msra.mxu0 0.0
      %787 = vmatprep.subr.mxu0 0.0
      %788 = vmatpush1.xpose.msra.mxu0 0.0
      %789 = vmatprep.subr.mxu0 0.0
      %790 = vmatpush1.xpose.msra.mxu0 0.0
      %791 = vmatprep.subr.mxu0 0.0
      %792 = vmatpush1.xpose.msra.mxu0 0.0
      %793 = vmatprep.mubr.f32.mxu0 0.0
      %794 = vmatmul.mubr.f32.gmra.mrb[0].mxu0 1.0
      %v795 = vpop.f32.mrb[0].mxu0
      %v796 = vadd.f32 0.0, %v795
      %v797 = vpop.f32.mrb[0].mxu0
      %798 = vdwg.mxu0
      %v799 = vadd.f32 %v713, %v714
      %v800 = vadd.f32 %v799, %v715
      %v801 = vadd.f32 %v800, %v716
      %v802 = vadd.f32 %v801, %v717
      %v803 = vadd.f32 %v802, %v718
      %v804 = vadd.f32 %v803, %v719
      %v805 = vadd.f32 %v804, %v720
      %v806 = vadd.f32 %v805, %v721
      %v807 = vadd.f32 %v806, %v722
      %v808 = vadd.f32 %v807, %v723
      %v809 = vadd.f32 %v808, %v724
      %v810 = vadd.f32 %v809, %v725
      %v811 = vadd.f32 %v810, %v726
      %v812 = vadd.f32 %v811, %v727
      %v813 = vadd.f32 %v812, %v728
      %v814 = vrot.slane %v813, 4
      %v815 = vadd.f32 %v813, %v814
      %v816 = vrot.slane %v815, 2
      %v817 = vadd.f32 %v815, %v816
      %v818 = vrot.slane %v817, 1
      %v819 = vadd.f32 %v817, %v818
      %v820 = vadd.s32 %v361, 104
      %v821 = vadd.s32 %v361, 112
      %v822 = vadd.s32 %v361, 120
      %v823 = vlaneseq
      %v824 = vand.u32 %v823, 127
      %vm825 = vcmp.eq.s32.totalorder %v361, %v824
      %vm826 = vcmp.eq.s32.totalorder %v362, %v824
      %vm827 = vcmp.eq.s32.totalorder %v363, %v824
      %vm828 = vcmp.eq.s32.totalorder %v364, %v824
      %vm829 = vcmp.eq.s32.totalorder %v365, %v824
      %vm830 = vcmp.eq.s32.totalorder %v366, %v824
      %vm831 = vcmp.eq.s32.totalorder %v367, %v824
      %vm832 = vcmp.eq.s32.totalorder %v368, %v824
      %vm833 = vcmp.eq.s32.totalorder %v369, %v824
      %vm834 = vcmp.eq.s32.totalorder %v370, %v824
      %vm835 = vcmp.eq.s32.totalorder %v371, %v824
      %vm836 = vcmp.eq.s32.totalorder %v372, %v824
      %vm837 = vcmp.eq.s32.totalorder %v373, %v824
      %vm838 = vcmp.eq.s32.totalorder %v820, %v824
      %vm839 = vcmp.eq.s32.totalorder %v821, %v824
      %vm840 = vcmp.eq.s32.totalorder %v822, %v824
      %v841 = vsel %vm825, %v713, 0.0
      %v842 = vsel %vm826, %v714, 0.0
      %v843 = vsel %vm827, %v715, 0.0
      %v844 = vsel %vm828, %v716, 0.0
      %v845 = vsel %vm829, %v717, 0.0
      %v846 = vsel %vm830, %v718, 0.0
      %v847 = vsel %vm831, %v719, 0.0
      %v848 = vsel %vm832, %v720, 0.0
      %v849 = vsel %vm833, %v721, 0.0
      %v850 = vsel %vm834, %v722, 0.0
      %v851 = vsel %vm835, %v723, 0.0
      %v852 = vsel %vm836, %v724, 0.0
      %v853 = vsel %vm837, %v725, 0.0
      %v854 = vsel %vm838, %v726, 0.0
      %v855 = vsel %vm839, %v727, 0.0
      %v856 = vsel %vm840, %v728, 0.0
      %v857 = vadd.f32 %v841, %v842
      %v858 = vadd.f32 %v857, %v843
      %v859 = vadd.f32 %v858, %v844
      %v860 = vadd.f32 %v859, %v845
      %v861 = vadd.f32 %v860, %v846
      %v862 = vadd.f32 %v861, %v847
      %v863 = vadd.f32 %v862, %v848
      %v864 = vadd.f32 %v863, %v849
      %v865 = vadd.f32 %v864, %v850
      %v866 = vadd.f32 %v865, %v851
      %v867 = vadd.f32 %v866, %v852
      %v868 = vadd.f32 %v867, %v853
      %v869 = vadd.f32 %v868, %v854
      %v870 = vadd.f32 %v869, %v855
      %v871 = vadd.f32 %v870, %v856
      %v872 = vrot.slane %v871, 4
      %v873 = vadd.f32 %v871, %v872
      %v874 = vrot.slane %v873, 2
      %v875 = vadd.f32 %v873, %v874
      %v876 = vrot.slane %v875, 1
      %v877 = vadd.f32 %v875, %v876
      %vm878 = vcmp.lt.s32.totalorder %v824, 40
      %v879 = vsel %vm878, %v796, 1.0
      %v880 = vsub.f32 %v819, %v877
      %v881 = vrcp.pop %v879
      %v882 = vmul.f32 %v879, %v881
      %v883 = vsub.f32 2.0, %v882
      %v884 = vmul.f32 %v881, %v883
      %v885 = vmul.f32 %v880, %v884
      %v886 = vsel %vm878, %v885, 0.0
      %vm887 = vcmask 1040384
      %v888 = vsel %vm887, %v886, 0.0
      %889 = vadd.xlane.f32.xlu0 %v888
      %v890 = vpop.xlane.xlu0 %889
      %v891 = vmul.f32 %v890, 0.025
      %892 = vst.msk [vmem:[#allocation7] sm:$0x1] %vm677, %v891
    $region17: #{tpu_custom_call.1} parent=1 // pred_fallthru
      _
    // Predicated region
    $region18: #{tpu_custom_call.1} parent=1 // pred_check
      _
    $region19: #{tpu_custom_call.1} parent=1 // pred_check_branch
      %894 = sbr.rel (0) target = $region21
    $region20: #{tpu_custom_call.1} parent=1 // pred_region
      %s896 = ssub.s32 16, 16
      %897 = vsyncadd [#allocation6], %s896
      %s899 = sshll.u32 [#allocation7], 4
      %s900 = int_to_ptr.vmem [resolvable:$true] %s899
      %902 = dma.vmem_to_hbm [thread:$0]  %s900, 16, %s1, [#allocation6]
    $region21: #{tpu_custom_call.1} parent=1 // pred_fallthru
      _
    // Predicated region
    $region22: #{tpu_custom_call.1} parent=1 // pred_check
      _
    $region23: #{tpu_custom_call.1} parent=1 // pred_check_branch
      %904 = sbr.rel (0) target = $region25
    $region24: #{tpu_custom_call.1} parent=1 // pred_region
      %905 = dma.done [#allocation6], 16
    $region25: #{tpu_custom_call.1} parent=1 // pred_fallthru
      _
    %906 = vsyncpa [#allocation5], 1
    %907 = vsyncpa [#allocation6], 1

</llo_original>
